<compile_context>
chip_gen: v7x
topology: tpu7x:2x2x1
jax: 0.10.0
libtpu: 0.0.40
codegen_flags: <defaults>
</compile_context>

<pallas_src>
import functools

import jax
import jax.numpy as jnp
from jax.experimental import pallas as pl
from jax.experimental.pallas import tpu as pltpu


def _maxpool_kernel(x_ref, o_ref, xp_ref, *, stride, h, w, h_out, w_out):
    # x_ref: (h, w, ncb) unpadded plane block, channels-last.
    # o_ref: (h_out, w_out, ncb).
    # xp_ref: (h+2, w+2, ncb) VMEM scratch holding the zero-padded slab.
    ncb = x_ref.shape[-1]
    hp, wp = h + 2, w + 2

    # Build the zero-padded slab in VMEM (reproduces F.pad(x, [1]*4) with zeros).
    xp_ref[...] = jnp.zeros(xp_ref.shape, xp_ref.dtype)
    xp_ref[1:h + 1, 1:w + 1, :] = x_ref[...]
    xp = xp_ref[...]                                      # (hp, wp, ncb)

    # Separable 3x3 max in the input dtype.
    # Pass 1: 3-wide max along W (sublane dim) with the output stride.
    tmp = None
    for dw in range(3):
        sl = jax.lax.slice(
            xp,
            (0, dw, 0),
            (hp, dw + stride * (w_out - 1) + 1, ncb),
            (1, stride, 1),
        )
        tmp = sl if tmp is None else jnp.maximum(tmp, sl)

    # Pass 2: 3-tall max along H (leading dim) with the output stride.
    acc = None
    for dh in range(3):
        sl = jax.lax.slice(
            tmp,
            (dh, 0, 0),
            (dh + stride * (h_out - 1) + 1, w_out, ncb),
            (stride, 1, 1),
        )
        acc = sl if acc is None else jnp.maximum(acc, sl)

    o_ref[...] = acc


def _pick_nc_block(nc, h, w, itemsize):
    # Largest 128-multiple channel block that divides N*C and keeps one padded slab small
    # (several buffers live at once; stay well under the 32 MiB default scoped VMEM, which
    # also covers v7x's smaller 64 MiB physical VMEM).
    budget_per_buffer = 2 * 1024 * 1024
    for cand in (1024, 512, 256, 128):
        if nc % cand == 0 and (h + 2) * (w + 2) * cand * itemsize <= budget_per_buffer:
            return cand
    return nc  # small / odd N*C: take the whole axis in one block (full-dim block is legal)


def max_pool(x, reduction: bool):
    """x: (N, C, H, W) float array. Returns pooled values, matching the torch module."""
    n, c, h, w = x.shape
    stride = 2 if reduction else 1
    h_out = (h + 2 - 3) // stride + 1
    w_out = (w + 2 - 3) // stride + 1
    nc = n * c

    # Channels-last layout: fused N*C becomes the lane dim (dense 128-lane loads/stores).
    xb = jnp.transpose(x.reshape(nc, h, w), (1, 2, 0))    # (h, w, nc)

    ncb = _pick_nc_block(nc, h, w, jnp.dtype(x.dtype).itemsize)
    grid = (nc // ncb,)

    kernel = functools.partial(
        _maxpool_kernel, stride=stride, h=h, w=w, h_out=h_out, w_out=w_out
    )

    out = pl.pallas_call(
        kernel,
        out_shape=jax.ShapeDtypeStruct((h_out, w_out, nc), x.dtype),
        grid_spec=pltpu.PrefetchScalarGridSpec(
            num_scalar_prefetch=0,
            grid=grid,
            in_specs=[pl.BlockSpec((h, w, ncb), lambda i: (0, 0, i))],
            out_specs=pl.BlockSpec((h_out, w_out, ncb), lambda i: (0, 0, i)),
            scratch_shapes=[pltpu.VMEM((h + 2, w + 2, ncb), x.dtype)],
        ),
        compiler_params=pltpu.CompilerParams(dimension_semantics=("parallel",)),
    )(xb)

    return jnp.transpose(out, (2, 0, 1)).reshape(n, c, h_out, w_out)


def _reference(x, reduction: bool):
    # Pure-JAX reference: zero-pad then 3x3 reduce_window max with the given stride.
    stride = 2 if reduction else 1
    xp = jnp.pad(x, ((0, 0), (0, 0), (1, 1), (1, 1)), constant_values=0.0)
    return jax.lax.reduce_window(
        xp, -jnp.inf, jax.lax.max,
        window_dimensions=(1, 1, 3, 3),
        window_strides=(1, 1, stride, stride),
        padding="VALID",
    ).astype(x.dtype)


if __name__ == "__main__":
    key = jax.random.PRNGKey(0)
    x = jax.random.normal(key, (2, 4, 16, 16), dtype=jnp.float32)

    # reduction=False -> stride 1 (output 16x16); reduction=True -> stride 2 (output 8x8)
    y0 = jax.block_until_ready(max_pool(x, reduction=False))
    y1 = jax.block_until_ready(max_pool(x, reduction=True))

    r0 = _reference(x, reduction=False)
    r1 = _reference(x, reduction=True)

    assert y0.shape == (2, 4, 16, 16), y0.shape
    assert y1.shape == (2, 4, 8, 8), y1.shape
    assert jnp.allclose(y0, r0), "stride-1 maxpool mismatch"
    assert jnp.allclose(y1, r1), "stride-2 maxpool mismatch"

    print("KERNEL_OK")
</pallas_src>

<mosaic_0001>
module attributes {stable_mosaic.version = 11 : i64} {
  func.func @_maxpool_kernel(%arg0: i32, %arg1: memref<16x16x8xf32, #tpu.memory_space<vmem>>, %arg2: memref<16x16x8xf32, #tpu.memory_space<vmem>>, %arg3: memref<18x18x8xf32, #tpu.memory_space<vmem>>) attributes {dimension_semantics = [#tpu.dimension_semantics<parallel>], iteration_bounds = array<i64: 1>, scalar_prefetch = 0 : i64, scratch_operands = 1 : i64, tpu.core_type = #tpu.core_type<tc>, window_params = [{transform_indices = @transform_0, window_bounds = array<i64: 16, 16, 8>}, {transform_indices = @transform_1, window_bounds = array<i64: 16, 16, 8>}]} {
    %cst = arith.constant 0.000000e+00 : f32
    %0 = vector.broadcast %cst : f32 to vector<18x18x8xf32>
    %c0 = arith.constant 0 : index
    %c0_0 = arith.constant 0 : index
    %c0_1 = arith.constant 0 : index
    %1 = vector.load %arg3[%c0, %c0_0, %c0_1] : memref<18x18x8xf32, #tpu.memory_space<vmem>>, vector<18x18x8xf32>
    tpu.vector_store %arg3[%c0, %c0_0, %c0_1], %0 {strides = array<i32>} : memref<18x18x8xf32, #tpu.memory_space<vmem>>, vector<18x18x8xf32>,
    %c0_2 = arith.constant 0 : index
    %c0_3 = arith.constant 0 : index
    %c0_4 = arith.constant 0 : index
    %2 = vector.load %arg1[%c0_2, %c0_3, %c0_4] : memref<16x16x8xf32, #tpu.memory_space<vmem>>, vector<16x16x8xf32>
    %c1 = arith.constant 1 : index
    %c1_5 = arith.constant 1 : index
    %c0_6 = arith.constant 0 : index
    %3 = vector.load %arg3[%c1, %c1_5, %c0_6] : memref<18x18x8xf32, #tpu.memory_space<vmem>>, vector<16x16x8xf32>
    tpu.vector_store %arg3[%c1, %c1_5, %c0_6], %2 {strides = array<i32>} : memref<18x18x8xf32, #tpu.memory_space<vmem>>, vector<16x16x8xf32>,
    %c0_7 = arith.constant 0 : index
    %c0_8 = arith.constant 0 : index
    %c0_9 = arith.constant 0 : index
    %4 = vector.load %arg3[%c0_7, %c0_8, %c0_9] : memref<18x18x8xf32, #tpu.memory_space<vmem>>, vector<18x18x8xf32>
    %5 = vector.extract_strided_slice %4 {offsets = [0, 0, 0], sizes = [18, 16, 8], strides = [1, 1, 1]} : vector<18x18x8xf32> to vector<18x16x8xf32>
    %6 = vector.extract_strided_slice %4 {offsets = [0, 1, 0], sizes = [18, 16, 8], strides = [1, 1, 1]} : vector<18x18x8xf32> to vector<18x16x8xf32>
    %7 = arith.maximumf %5, %6 : vector<18x16x8xf32>
    %8 = vector.extract_strided_slice %4 {offsets = [0, 2, 0], sizes = [18, 16, 8], strides = [1, 1, 1]} : vector<18x18x8xf32> to vector<18x16x8xf32>
    %9 = arith.maximumf %7, %8 : vector<18x16x8xf32>
    %10 = vector.extract_strided_slice %9 {offsets = [0, 0, 0], sizes = [16, 16, 8], strides = [1, 1, 1]} : vector<18x16x8xf32> to vector<16x16x8xf32>
    %11 = vector.extract_strided_slice %9 {offsets = [1, 0, 0], sizes = [16, 16, 8], strides = [1, 1, 1]} : vector<18x16x8xf32> to vector<16x16x8xf32>
    %12 = arith.maximumf %10, %11 : vector<16x16x8xf32>
    %13 = vector.extract_strided_slice %9 {offsets = [2, 0, 0], sizes = [16, 16, 8], strides = [1, 1, 1]} : vector<18x16x8xf32> to vector<16x16x8xf32>
    %14 = arith.maximumf %12, %13 : vector<16x16x8xf32>
    %c0_10 = arith.constant 0 : index
    %c0_11 = arith.constant 0 : index
    %c0_12 = arith.constant 0 : index
    %15 = vector.load %arg2[%c0_10, %c0_11, %c0_12] : memref<16x16x8xf32, #tpu.memory_space<vmem>>, vector<16x16x8xf32>
    tpu.vector_store %arg2[%c0_10, %c0_11, %c0_12], %14 {strides = array<i32>} : memref<16x16x8xf32, #tpu.memory_space<vmem>>, vector<16x16x8xf32>,
    return
  }
  func.func @transform_0(%arg0: i32) -> (i32, i32, i32) {
    %c0_i32 = arith.constant 0 : i32
    %c0_i32_0 = arith.constant 0 : i32
    %c0_i32_1 = arith.constant 0 : i32
    return %c0_i32, %c0_i32_0, %arg0 : i32, i32, i32
  }
  func.func @transform_1(%arg0: i32) -> (i32, i32, i32) {
    %c0_i32 = arith.constant 0 : i32
    %c0_i32_0 = arith.constant 0 : i32
    %c0_i32_1 = arith.constant 0 : i32
    return %c0_i32, %c0_i32_0, %arg0 : i32, i32, i32
  }
}

</mosaic_0001>

<llo_original>
// kernel: tpu_custom_call.1
$region0: #{tpu_custom_call.1}
  #allocation0 [shape = 'u32[]', space=smem, size = 0x4, offset = 0x4, fixed_abs, tag = 'smem constant byte address 0x4 - core index']
  #allocation1 [shape = 'u32[144,128]{1,0:T(1,128)}', space=vmem, size = 0x12000, scoped, tag = 'internal scratch']
  #allocation2 [shape = 'f32[18,18,8]{2,1,0:T(8,128)}', space=vmem, size = 0x36000, scoped, tag = 'scratch operand']
  %s0 = inlined_call_operand.vmem [shape: f32[16,16,8], index: 0, kind: input, shape index: {}]
  %s1 = inlined_call_operand.vmem [shape: f32[16,16,8], index: 1, kind: output, shape index: {}]
  %s2 = sld [smem:[#allocation0]]
  $region14: #{tpu_custom_call.1} parent=0
    _
  %s4 = ssub.s32 1, %s2
  %s5 = scalar_select 0, %s4, %s2
  // Predicated region
  $region2: #{tpu_custom_call.1} parent=0 // pred_check
    _
  $region3: #{tpu_custom_call.1} parent=0 // pred_check_branch
    %7 = sbr.rel (0) target = $region5
  $region4: #{tpu_custom_call.1} parent=0 // pred_region
    _
  $region5: #{tpu_custom_call.1} parent=0 // pred_fallthru
    _
  %vm8 = vcmask 64512
  %9 = vst.msk [vmem:[#allocation2] sm:$0xff] %vm8, 0.0
  %10 = vst.msk [vmem:[#allocation2 + $0x8] sm:$0xff] %vm8, 0.0
  %vm11 = vcmask 58368
  %12 = vst.msk [vmem:[#allocation2 + $0x10] sm:$0x3] %vm11, 0.0
  %13 = vst.msk [vmem:[#allocation2 + $0x18] sm:$0xff] %vm8, 0.0
  %14 = vst.msk [vmem:[#allocation2 + $0x20] sm:$0xff] %vm8, 0.0
  %15 = vst.msk [vmem:[#allocation2 + $0x28] sm:$0x3] %vm11, 0.0
  %16 = vst.msk [vmem:[#allocation2 + $0x30] sm:$0xff] %vm8, 0.0
  %17 = vst.msk [vmem:[#allocation2 + $0x38] sm:$0xff] %vm8, 0.0
  %18 = vst.msk [vmem:[#allocation2 + $0x40] sm:$0x3] %vm11, 0.0
  %19 = vst.msk [vmem:[#allocation2 + $0x48] sm:$0xff] %vm8, 0.0
  %20 = vst.msk [vmem:[#allocation2 + $0x50] sm:$0xff] %vm8, 0.0
  %21 = vst.msk [vmem:[#allocation2 + $0x58] sm:$0x3] %vm11, 0.0
  %22 = vst.msk [vmem:[#allocation2 + $0x60] sm:$0xff] %vm8, 0.0
  %23 = vst.msk [vmem:[#allocation2 + $0x68] sm:$0xff] %vm8, 0.0
  %24 = vst.msk [vmem:[#allocation2 + $0x70] sm:$0x3] %vm11, 0.0
  %25 = vst.msk [vmem:[#allocation2 + $0x78] sm:$0xff] %vm8, 0.0
  %26 = vst.msk [vmem:[#allocation2 + $0x80] sm:$0xff] %vm8, 0.0
  %27 = vst.msk [vmem:[#allocation2 + $0x88] sm:$0x3] %vm11, 0.0
  %28 = vst.msk [vmem:[#allocation2 + $0x90] sm:$0xff] %vm8, 0.0
  %29 = vst.msk [vmem:[#allocation2 + $0x98] sm:$0xff] %vm8, 0.0
  %30 = vst.msk [vmem:[#allocation2 + $0xa0] sm:$0x3] %vm11, 0.0
  %31 = vst.msk [vmem:[#allocation2 + $0xa8] sm:$0xff] %vm8, 0.0
  %32 = vst.msk [vmem:[#allocation2 + $0xb0] sm:$0xff] %vm8, 0.0
  %33 = vst.msk [vmem:[#allocation2 + $0xb8] sm:$0x3] %vm11, 0.0
  %34 = vst.msk [vmem:[#allocation2 + $0xc0] sm:$0xff] %vm8, 0.0
  %35 = vst.msk [vmem:[#allocation2 + $0xc8] sm:$0xff] %vm8, 0.0
  %36 = vst.msk [vmem:[#allocation2 + $0xd0] sm:$0x3] %vm11, 0.0
  %37 = vst.msk [vmem:[#allocation2 + $0xd8] sm:$0xff] %vm8, 0.0
  %38 = vst.msk [vmem:[#allocation2 + $0xe0] sm:$0xff] %vm8, 0.0
  %39 = vst.msk [vmem:[#allocation2 + $0xe8] sm:$0x3] %vm11, 0.0
  %40 = vst.msk [vmem:[#allocation2 + $0xf0] sm:$0xff] %vm8, 0.0
  %41 = vst.msk [vmem:[#allocation2 + $0xf8] sm:$0xff] %vm8, 0.0
  %42 = vst.msk [vmem:[#allocation2 + $0x100] sm:$0x3] %vm11, 0.0
  %43 = vst.msk [vmem:[#allocation2 + $0x108] sm:$0xff] %vm8, 0.0
  %44 = vst.msk [vmem:[#allocation2 + $0x110] sm:$0xff] %vm8, 0.0
  %45 = vst.msk [vmem:[#allocation2 + $0x118] sm:$0x3] %vm11, 0.0
  %46 = vst.msk [vmem:[#allocation2 + $0x120] sm:$0xff] %vm8, 0.0
  %47 = vst.msk [vmem:[#allocation2 + $0x128] sm:$0xff] %vm8, 0.0
  %48 = vst.msk [vmem:[#allocation2 + $0x130] sm:$0x3] %vm11, 0.0
  %49 = vst.msk [vmem:[#allocation2 + $0x138] sm:$0xff] %vm8, 0.0
  %50 = vst.msk [vmem:[#allocation2 + $0x140] sm:$0xff] %vm8, 0.0
  %51 = vst.msk [vmem:[#allocation2 + $0x148] sm:$0x3] %vm11, 0.0
  %52 = vst.msk [vmem:[#allocation2 + $0x150] sm:$0xff] %vm8, 0.0
  %53 = vst.msk [vmem:[#allocation2 + $0x158] sm:$0xff] %vm8, 0.0
  %54 = vst.msk [vmem:[#allocation2 + $0x160] sm:$0x3] %vm11, 0.0
  %55 = vst.msk [vmem:[#allocation2 + $0x168] sm:$0xff] %vm8, 0.0
  %56 = vst.msk [vmem:[#allocation2 + $0x170] sm:$0xff] %vm8, 0.0
  %57 = vst.msk [vmem:[#allocation2 + $0x178] sm:$0x3] %vm11, 0.0
  %58 = vst.msk [vmem:[#allocation2 + $0x180] sm:$0xff] %vm8, 0.0
  %59 = vst.msk [vmem:[#allocation2 + $0x188] sm:$0xff] %vm8, 0.0
  %60 = vst.msk [vmem:[#allocation2 + $0x190] sm:$0x3] %vm11, 0.0
  %61 = vst.msk [vmem:[#allocation2 + $0x198] sm:$0xff] %vm8, 0.0
  %62 = vst.msk [vmem:[#allocation2 + $0x1a0] sm:$0xff] %vm8, 0.0
  %63 = vst.msk [vmem:[#allocation2 + $0x1a8] sm:$0x3] %vm11, 0.0
  %v64 = vld [vmem:[%s0] sm:$0xff]
  %v65 = vld [vmem:[%s0 + $0x8] sm:$0xff]
  %v66 = vld [vmem:[%s0 + $0x10] sm:$0xff]
  %v67 = vld [vmem:[%s0 + $0x18] sm:$0xff]
  %v68 = vld [vmem:[%s0 + $0x20] sm:$0xff]
  %v69 = vld [vmem:[%s0 + $0x28] sm:$0xff]
  %v70 = vld [vmem:[%s0 + $0x30] sm:$0xff]
  %v71 = vld [vmem:[%s0 + $0x38] sm:$0xff]
  %v72 = vld [vmem:[%s0 + $0x40] sm:$0xff]
  %v73 = vld [vmem:[%s0 + $0x48] sm:$0xff]
  %v74 = vld [vmem:[%s0 + $0x50] sm:$0xff]
  %v75 = vld [vmem:[%s0 + $0x58] sm:$0xff]
  %v76 = vld [vmem:[%s0 + $0x60] sm:$0xff]
  %v77 = vld [vmem:[%s0 + $0x68] sm:$0xff]
  %v78 = vld [vmem:[%s0 + $0x70] sm:$0xff]
  %v79 = vld [vmem:[%s0 + $0x78] sm:$0xff]
  %v80 = vld [vmem:[%s0 + $0x80] sm:$0xff]
  %v81 = vld [vmem:[%s0 + $0x88] sm:$0xff]
  %v82 = vld [vmem:[%s0 + $0x90] sm:$0xff]
  %v83 = vld [vmem:[%s0 + $0x98] sm:$0xff]
  %v84 = vld [vmem:[%s0 + $0xa0] sm:$0xff]
  %v85 = vld [vmem:[%s0 + $0xa8] sm:$0xff]
  %v86 = vld [vmem:[%s0 + $0xb0] sm:$0xff]
  %v87 = vld [vmem:[%s0 + $0xb8] sm:$0xff]
  %v88 = vld [vmem:[%s0 + $0xc0] sm:$0xff]
  %v89 = vld [vmem:[%s0 + $0xc8] sm:$0xff]
  %v90 = vld [vmem:[%s0 + $0xd0] sm:$0xff]
  %v91 = vld [vmem:[%s0 + $0xd8] sm:$0xff]
  %v92 = vld [vmem:[%s0 + $0xe0] sm:$0xff]
  %v93 = vld [vmem:[%s0 + $0xe8] sm:$0xff]
  %v94 = vld [vmem:[%s0 + $0xf0] sm:$0xff]
  %v95 = vld [vmem:[%s0 + $0xf8] sm:$0xff]
  %s96 = scalar_lea.vmem [#allocation2], 24
  %97 = vst.msk [vmem:[%s96 + $0x1] sm:$0xff] %vm8, %v64
  %98 = vst.msk [vmem:[%s96 + $0x9] sm:$0xff] %vm8, %v65
  %99 = vst.msk [vmem:[%s96 + $0x19] sm:$0xff] %vm8, %v66
  %100 = vst.msk [vmem:[%s96 + $0x21] sm:$0xff] %vm8, %v67
  %101 = vst.msk [vmem:[%s96 + $0x31] sm:$0xff] %vm8, %v68
  %102 = vst.msk [vmem:[%s96 + $0x39] sm:$0xff] %vm8, %v69
  %103 = vst.msk [vmem:[%s96 + $0x49] sm:$0xff] %vm8, %v70
  %104 = vst.msk [vmem:[%s96 + $0x51] sm:$0xff] %vm8, %v71
  %105 = vst.msk [vmem:[%s96 + $0x61] sm:$0xff] %vm8, %v72
  %106 = vst.msk [vmem:[%s96 + $0x69] sm:$0xff] %vm8, %v73
  %107 = vst.msk [vmem:[%s96 + $0x79] sm:$0xff] %vm8, %v74
  %108 = vst.msk [vmem:[%s96 + $0x81] sm:$0xff] %vm8, %v75
  %109 = vst.msk [vmem:[%s96 + $0x91] sm:$0xff] %vm8, %v76
  %110 = vst.msk [vmem:[%s96 + $0x99] sm:$0xff] %vm8, %v77
  %111 = vst.msk [vmem:[%s96 + $0xa9] sm:$0xff] %vm8, %v78
  %112 = vst.msk [vmem:[%s96 + $0xb1] sm:$0xff] %vm8, %v79
  %113 = vst.msk [vmem:[%s96 + $0xc1] sm:$0xff] %vm8, %v80
  %114 = vst.msk [vmem:[%s96 + $0xc9] sm:$0xff] %vm8, %v81
  %115 = vst.msk [vmem:[%s96 + $0xd9] sm:$0xff] %vm8, %v82
  %116 = vst.msk [vmem:[%s96 + $0xe1] sm:$0xff] %vm8, %v83
  %117 = vst.msk [vmem:[%s96 + $0xf1] sm:$0xff] %vm8, %v84
  %118 = vst.msk [vmem:[%s96 + $0xf9] sm:$0xff] %vm8, %v85
  %119 = vst.msk [vmem:[%s96 + $0x109] sm:$0xff] %vm8, %v86
  %120 = vst.msk [vmem:[%s96 + $0x111] sm:$0xff] %vm8, %v87
  %121 = vst.msk [vmem:[%s96 + $0x121] sm:$0xff] %vm8, %v88
  %122 = vst.msk [vmem:[%s96 + $0x129] sm:$0xff] %vm8, %v89
  %123 = vst.msk [vmem:[%s96 + $0x139] sm:$0xff] %vm8, %v90
  %124 = vst.msk [vmem:[%s96 + $0x141] sm:$0xff] %vm8, %v91
  %125 = vst.msk [vmem:[%s96 + $0x151] sm:$0xff] %vm8, %v92
  %126 = vst.msk [vmem:[%s96 + $0x159] sm:$0xff] %vm8, %v93
  %127 = vst.msk [vmem:[%s96 + $0x169] sm:$0xff] %vm8, %v94
  %128 = vst.msk [vmem:[%s96 + $0x171] sm:$0xff] %vm8, %v95
  %v129 = vld [vmem:[#allocation2] sm:$0xff]
  %v130 = vld [vmem:[#allocation2 + $0x8] sm:$0xff]
  %v131 = vld [vmem:[#allocation2 + $0x10] sm:$0x3]
  %v132 = vld [vmem:[#allocation2 + $0x18] sm:$0xff]
  %v133 = vld [vmem:[#allocation2 + $0x20] sm:$0xff]
  %v134 = vld [vmem:[#allocation2 + $0x28] sm:$0x3]
  %v135 = vld [vmem:[#allocation2 + $0x30] sm:$0xff]
  %v136 = vld [vmem:[#allocation2 + $0x38] sm:$0xff]
  %v137 = vld [vmem:[#allocation2 + $0x40] sm:$0x3]
  %v138 = vld [vmem:[#allocation2 + $0x48] sm:$0xff]
  %v139 = vld [vmem:[#allocation2 + $0x50] sm:$0xff]
  %v140 = vld [vmem:[#allocation2 + $0x58] sm:$0x3]
  %v141 = vld [vmem:[#allocation2 + $0x60] sm:$0xff]
  %v142 = vld [vmem:[#allocation2 + $0x68] sm:$0xff]
  %v143 = vld [vmem:[#allocation2 + $0x70] sm:$0x3]
  %v144 = vld [vmem:[#allocation2 + $0x78] sm:$0xff]
  %v145 = vld [vmem:[#allocation2 + $0x80] sm:$0xff]
  %v146 = vld [vmem:[#allocation2 + $0x88] sm:$0x3]
  %v147 = vld [vmem:[#allocation2 + $0x90] sm:$0xff]
  %v148 = vld [vmem:[#allocation2 + $0x98] sm:$0xff]
  %v149 = vld [vmem:[#allocation2 + $0xa0] sm:$0x3]
  %v150 = vld [vmem:[#allocation2 + $0xa8] sm:$0xff]
  %v151 = vld [vmem:[#allocation2 + $0xb0] sm:$0xff]
  %v152 = vld [vmem:[#allocation2 + $0xb8] sm:$0x3]
  %v153 = vld [vmem:[#allocation2 + $0xc0] sm:$0xff]
  %v154 = vld [vmem:[#allocation2 + $0xc8] sm:$0xff]
  %v155 = vld [vmem:[#allocation2 + $0xd0] sm:$0x3]
  %v156 = vld [vmem:[#allocation2 + $0xd8] sm:$0xff]
  %v157 = vld [vmem:[#allocation2 + $0xe0] sm:$0xff]
  %v158 = vld [vmem:[#allocation2 + $0xe8] sm:$0x3]
  %v159 = vld [vmem:[#allocation2 + $0xf0] sm:$0xff]
  %v160 = vld [vmem:[#allocation2 + $0xf8] sm:$0xff]
  %v161 = vld [vmem:[#allocation2 + $0x100] sm:$0x3]
  %v162 = vld [vmem:[#allocation2 + $0x108] sm:$0xff]
  %v163 = vld [vmem:[#allocation2 + $0x110] sm:$0xff]
  %v164 = vld [vmem:[#allocation2 + $0x118] sm:$0x3]
  %v165 = vld [vmem:[#allocation2 + $0x120] sm:$0xff]
  %v166 = vld [vmem:[#allocation2 + $0x128] sm:$0xff]
  %v167 = vld [vmem:[#allocation2 + $0x130] sm:$0x3]
  %v168 = vld [vmem:[#allocation2 + $0x138] sm:$0xff]
  %v169 = vld [vmem:[#allocation2 + $0x140] sm:$0xff]
  %v170 = vld [vmem:[#allocation2 + $0x148] sm:$0x3]
  %v171 = vld [vmem:[#allocation2 + $0x150] sm:$0xff]
  %v172 = vld [vmem:[#allocation2 + $0x158] sm:$0xff]
  %v173 = vld [vmem:[#allocation2 + $0x160] sm:$0x3]
  %v174 = vld [vmem:[#allocation2 + $0x168] sm:$0xff]
  %v175 = vld [vmem:[#allocation2 + $0x170] sm:$0xff]
  %v176 = vld [vmem:[#allocation2 + $0x178] sm:$0x3]
  %v177 = vld [vmem:[#allocation2 + $0x180] sm:$0xff]
  %v178 = vld [vmem:[#allocation2 + $0x188] sm:$0xff]
  %v179 = vld [vmem:[#allocation2 + $0x190] sm:$0x3]
  %v180 = vld [vmem:[#allocation2 + $0x198] sm:$0xff]
  %v181 = vld [vmem:[#allocation2 + $0x1a0] sm:$0xff]
  %v182 = vld [vmem:[#allocation2 + $0x1a8] sm:$0x3]
  %vm237 = vcmask 1046528
  %v238 = vrot.slane %v129, 1
  %v239 = vrot.slane %v130, 1
  %v240 = vsel %vm237, %v238, %v239
  %v241 = vrot.slane %v131, 1
  %v242 = vsel %vm237, %v239, %v241
  %v243 = vrot.slane %v132, 1
  %v244 = vrot.slane %v133, 1
  %v245 = vsel %vm237, %v243, %v244
  %v246 = vrot.slane %v134, 1
  %v247 = vsel %vm237, %v244, %v246
  %v248 = vrot.slane %v135, 1
  %v249 = vrot.slane %v136, 1
  %v250 = vsel %vm237, %v248, %v249
  %v251 = vrot.slane %v137, 1
  %v252 = vsel %vm237, %v249, %v251
  %v253 = vrot.slane %v138, 1
  %v254 = vrot.slane %v139, 1
  %v255 = vsel %vm237, %v253, %v254
  %v256 = vrot.slane %v140, 1
  %v257 = vsel %vm237, %v254, %v256
  %v258 = vrot.slane %v141, 1
  %v259 = vrot.slane %v142, 1
  %v260 = vsel %vm237, %v258, %v259
  %v261 = vrot.slane %v143, 1
  %v262 = vsel %vm237, %v259, %v261
  %v263 = vrot.slane %v144, 1
  %v264 = vrot.slane %v145, 1
  %v265 = vsel %vm237, %v263, %v264
  %v266 = vrot.slane %v146, 1
  %v267 = vsel %vm237, %v264, %v266
  %v268 = vrot.slane %v147, 1
  %v269 = vrot.slane %v148, 1
  %v270 = vsel %vm237, %v268, %v269
  %v271 = vrot.slane %v149, 1
  %v272 = vsel %vm237, %v269, %v271
  %v273 = vrot.slane %v150, 1
  %v274 = vrot.slane %v151, 1
  %v275 = vsel %vm237, %v273, %v274
  %v276 = vrot.slane %v152, 1
  %v277 = vsel %vm237, %v274, %v276
  %v278 = vrot.slane %v153, 1
  %v279 = vrot.slane %v154, 1
  %v280 = vsel %vm237, %v278, %v279
  %v281 = vrot.slane %v155, 1
  %v282 = vsel %vm237, %v279, %v281
  %v283 = vrot.slane %v156, 1
  %v284 = vrot.slane %v157, 1
  %v285 = vsel %vm237, %v283, %v284
  %v286 = vrot.slane %v158, 1
  %v287 = vsel %vm237, %v284, %v286
  %v288 = vrot.slane %v159, 1
  %v289 = vrot.slane %v160, 1
  %v290 = vsel %vm237, %v288, %v289
  %v291 = vrot.slane %v161, 1
  %v292 = vsel %vm237, %v289, %v291
  %v293 = vrot.slane %v162, 1
  %v294 = vrot.slane %v163, 1
  %v295 = vsel %vm237, %v293, %v294
  %v296 = vrot.slane %v164, 1
  %v297 = vsel %vm237, %v294, %v296
  %v298 = vrot.slane %v165, 1
  %v299 = vrot.slane %v166, 1
  %v300 = vsel %vm237, %v298, %v299
  %v301 = vrot.slane %v167, 1
  %v302 = vsel %vm237, %v299, %v301
  %v303 = vrot.slane %v168, 1
  %v304 = vrot.slane %v169, 1
  %v305 = vsel %vm237, %v303, %v304
  %v306 = vrot.slane %v170, 1
  %v307 = vsel %vm237, %v304, %v306
  %v308 = vrot.slane %v171, 1
  %v309 = vrot.slane %v172, 1
  %v310 = vsel %vm237, %v308, %v309
  %v311 = vrot.slane %v173, 1
  %v312 = vsel %vm237, %v309, %v311
  %v313 = vrot.slane %v174, 1
  %v314 = vrot.slane %v175, 1
  %v315 = vsel %vm237, %v313, %v314
  %v316 = vrot.slane %v176, 1
  %v317 = vsel %vm237, %v314, %v316
  %v318 = vrot.slane %v177, 1
  %v319 = vrot.slane %v178, 1
  %v320 = vsel %vm237, %v318, %v319
  %v321 = vrot.slane %v179, 1
  %v322 = vsel %vm237, %v319, %v321
  %v323 = vrot.slane %v180, 1
  %v324 = vrot.slane %v181, 1
  %v325 = vsel %vm237, %v323, %v324
  %v326 = vrot.slane %v182, 1
  %v327 = vsel %vm237, %v324, %v326
  %v364 = vmax.f32 %v129, %v240
  %v365 = vmax.f32 %v130, %v242
  %v366 = vmax.f32 %v132, %v245
  %v367 = vmax.f32 %v133, %v247
  %v368 = vmax.f32 %v135, %v250
  %v369 = vmax.f32 %v136, %v252
  %v370 = vmax.f32 %v138, %v255
  %v371 = vmax.f32 %v139, %v257
  %v372 = vmax.f32 %v141, %v260
  %v373 = vmax.f32 %v142, %v262
  %v374 = vmax.f32 %v144, %v265
  %v375 = vmax.f32 %v145, %v267
  %v376 = vmax.f32 %v147, %v270
  %v377 = vmax.f32 %v148, %v272
  %v378 = vmax.f32 %v150, %v275
  %v379 = vmax.f32 %v151, %v277
  %v380 = vmax.f32 %v153, %v280
  %v381 = vmax.f32 %v154, %v282
  %v382 = vmax.f32 %v156, %v285
  %v383 = vmax.f32 %v157, %v287
  %v384 = vmax.f32 %v159, %v290
  %v385 = vmax.f32 %v160, %v292
  %v386 = vmax.f32 %v162, %v295
  %v387 = vmax.f32 %v163, %v297
  %v388 = vmax.f32 %v165, %v300
  %v389 = vmax.f32 %v166, %v302
  %v390 = vmax.f32 %v168, %v305
  %v391 = vmax.f32 %v169, %v307
  %v392 = vmax.f32 %v171, %v310
  %v393 = vmax.f32 %v172, %v312
  %v394 = vmax.f32 %v174, %v315
  %v395 = vmax.f32 %v175, %v317
  %v396 = vmax.f32 %v177, %v320
  %v397 = vmax.f32 %v178, %v322
  %v398 = vmax.f32 %v180, %v325
  %v399 = vmax.f32 %v181, %v327
  %vm400 = vcmask 1045504
  %v401 = vrot.slane %v129, 2
  %v402 = vrot.slane %v130, 2
  %v403 = vsel %vm400, %v401, %v402
  %v404 = vrot.slane %v131, 2
  %v405 = vsel %vm400, %v402, %v404
  %v406 = vrot.slane %v132, 2
  %v407 = vrot.slane %v133, 2
  %v408 = vsel %vm400, %v406, %v407
  %v409 = vrot.slane %v134, 2
  %v410 = vsel %vm400, %v407, %v409
  %v411 = vrot.slane %v135, 2
  %v412 = vrot.slane %v136, 2
  %v413 = vsel %vm400, %v411, %v412
  %v414 = vrot.slane %v137, 2
  %v415 = vsel %vm400, %v412, %v414
  %v416 = vrot.slane %v138, 2
  %v417 = vrot.slane %v139, 2
  %v418 = vsel %vm400, %v416, %v417
  %v419 = vrot.slane %v140, 2
  %v420 = vsel %vm400, %v417, %v419
  %v421 = vrot.slane %v141, 2
  %v422 = vrot.slane %v142, 2
  %v423 = vsel %vm400, %v421, %v422
  %v424 = vrot.slane %v143, 2
  %v425 = vsel %vm400, %v422, %v424
  %v426 = vrot.slane %v144, 2
  %v427 = vrot.slane %v145, 2
  %v428 = vsel %vm400, %v426, %v427
  %v429 = vrot.slane %v146, 2
  %v430 = vsel %vm400, %v427, %v429
  %v431 = vrot.slane %v147, 2
  %v432 = vrot.slane %v148, 2
  %v433 = vsel %vm400, %v431, %v432
  %v434 = vrot.slane %v149, 2
  %v435 = vsel %vm400, %v432, %v434
  %v436 = vrot.slane %v150, 2
  %v437 = vrot.slane %v151, 2
  %v438 = vsel %vm400, %v436, %v437
  %v439 = vrot.slane %v152, 2
  %v440 = vsel %vm400, %v437, %v439
  %v441 = vrot.slane %v153, 2
  %v442 = vrot.slane %v154, 2
  %v443 = vsel %vm400, %v441, %v442
  %v444 = vrot.slane %v155, 2
  %v445 = vsel %vm400, %v442, %v444
  %v446 = vrot.slane %v156, 2
  %v447 = vrot.slane %v157, 2
  %v448 = vsel %vm400, %v446, %v447
  %v449 = vrot.slane %v158, 2
  %v450 = vsel %vm400, %v447, %v449
  %v451 = vrot.slane %v159, 2
  %v452 = vrot.slane %v160, 2
  %v453 = vsel %vm400, %v451, %v452
  %v454 = vrot.slane %v161, 2
  %v455 = vsel %vm400, %v452, %v454
  %v456 = vrot.slane %v162, 2
  %v457 = vrot.slane %v163, 2
  %v458 = vsel %vm400, %v456, %v457
  %v459 = vrot.slane %v164, 2
  %v460 = vsel %vm400, %v457, %v459
  %v461 = vrot.slane %v165, 2
  %v462 = vrot.slane %v166, 2
  %v463 = vsel %vm400, %v461, %v462
  %v464 = vrot.slane %v167, 2
  %v465 = vsel %vm400, %v462, %v464
  %v466 = vrot.slane %v168, 2
  %v467 = vrot.slane %v169, 2
  %v468 = vsel %vm400, %v466, %v467
  %v469 = vrot.slane %v170, 2
  %v470 = vsel %vm400, %v467, %v469
  %v471 = vrot.slane %v171, 2
  %v472 = vrot.slane %v172, 2
  %v473 = vsel %vm400, %v471, %v472
  %v474 = vrot.slane %v173, 2
  %v475 = vsel %vm400, %v472, %v474
  %v476 = vrot.slane %v174, 2
  %v477 = vrot.slane %v175, 2
  %v478 = vsel %vm400, %v476, %v477
  %v479 = vrot.slane %v176, 2
  %v480 = vsel %vm400, %v477, %v479
  %v481 = vrot.slane %v177, 2
  %v482 = vrot.slane %v178, 2
  %v483 = vsel %vm400, %v481, %v482
  %v484 = vrot.slane %v179, 2
  %v485 = vsel %vm400, %v482, %v484
  %v486 = vrot.slane %v180, 2
  %v487 = vrot.slane %v181, 2
  %v488 = vsel %vm400, %v486, %v487
  %v489 = vrot.slane %v182, 2
  %v490 = vsel %vm400, %v487, %v489
  %v527 = vmax.f32 %v364, %v403
  %v528 = vmax.f32 %v365, %v405
  %v529 = vmax.f32 %v366, %v408
  %v530 = vmax.f32 %v367, %v410
  %v531 = vmax.f32 %v368, %v413
  %v532 = vmax.f32 %v369, %v415
  %v533 = vmax.f32 %v370, %v418
  %v534 = vmax.f32 %v371, %v420
  %v535 = vmax.f32 %v372, %v423
  %v536 = vmax.f32 %v373, %v425
  %v537 = vmax.f32 %v374, %v428
  %v538 = vmax.f32 %v375, %v430
  %v539 = vmax.f32 %v376, %v433
  %v540 = vmax.f32 %v377, %v435
  %v541 = vmax.f32 %v378, %v438
  %v542 = vmax.f32 %v379, %v440
  %v543 = vmax.f32 %v380, %v443
  %v544 = vmax.f32 %v381, %v445
  %v545 = vmax.f32 %v382, %v448
  %v546 = vmax.f32 %v383, %v450
  %v547 = vmax.f32 %v384, %v453
  %v548 = vmax.f32 %v385, %v455
  %v549 = vmax.f32 %v386, %v458
  %v550 = vmax.f32 %v387, %v460
  %v551 = vmax.f32 %v388, %v463
  %v552 = vmax.f32 %v389, %v465
  %v553 = vmax.f32 %v390, %v468
  %v554 = vmax.f32 %v391, %v470
  %v555 = vmax.f32 %v392, %v473
  %v556 = vmax.f32 %v393, %v475
  %v557 = vmax.f32 %v394, %v478
  %v558 = vmax.f32 %v395, %v480
  %v559 = vmax.f32 %v396, %v483
  %v560 = vmax.f32 %v397, %v485
  %v561 = vmax.f32 %v398, %v488
  %v562 = vmax.f32 %v399, %v490
  %v563 = vmax.f32 %v527, %v529
  %v564 = vmax.f32 %v528, %v530
  %v565 = vmax.f32 %v529, %v531
  %v566 = vmax.f32 %v530, %v532
  %v567 = vmax.f32 %v531, %v533
  %v568 = vmax.f32 %v532, %v534
  %v569 = vmax.f32 %v533, %v535
  %v570 = vmax.f32 %v534, %v536
  %v571 = vmax.f32 %v535, %v537
  %v572 = vmax.f32 %v536, %v538
  %v573 = vmax.f32 %v537, %v539
  %v574 = vmax.f32 %v538, %v540
  %v575 = vmax.f32 %v539, %v541
  %v576 = vmax.f32 %v540, %v542
  %v577 = vmax.f32 %v541, %v543
  %v578 = vmax.f32 %v542, %v544
  %v579 = vmax.f32 %v543, %v545
  %v580 = vmax.f32 %v544, %v546
  %v581 = vmax.f32 %v545, %v547
  %v582 = vmax.f32 %v546, %v548
  %v583 = vmax.f32 %v547, %v549
  %v584 = vmax.f32 %v548, %v550
  %v585 = vmax.f32 %v549, %v551
  %v586 = vmax.f32 %v550, %v552
  %v587 = vmax.f32 %v551, %v553
  %v588 = vmax.f32 %v552, %v554
  %v589 = vmax.f32 %v553, %v555
  %v590 = vmax.f32 %v554, %v556
  %v591 = vmax.f32 %v555, %v557
  %v592 = vmax.f32 %v556, %v558
  %v593 = vmax.f32 %v557, %v559
  %v594 = vmax.f32 %v558, %v560
  %v595 = vmax.f32 %v563, %v531
  %v596 = vmax.f32 %v564, %v532
  %v597 = vmax.f32 %v565, %v533
  %v598 = vmax.f32 %v566, %v534
  %v599 = vmax.f32 %v567, %v535
  %v600 = vmax.f32 %v568, %v536
  %v601 = vmax.f32 %v569, %v537
  %v602 = vmax.f32 %v570, %v538
  %v603 = vmax.f32 %v571, %v539
  %v604 = vmax.f32 %v572, %v540
  %v605 = vmax.f32 %v573, %v541
  %v606 = vmax.f32 %v574, %v542
  %v607 = vmax.f32 %v575, %v543
  %v608 = vmax.f32 %v576, %v544
  %v609 = vmax.f32 %v577, %v545
  %v610 = vmax.f32 %v578, %v546
  %v611 = vmax.f32 %v579, %v547
  %v612 = vmax.f32 %v580, %v548
  %v613 = vmax.f32 %v581, %v549
  %v614 = vmax.f32 %v582, %v550
  %v615 = vmax.f32 %v583, %v551
  %v616 = vmax.f32 %v584, %v552
  %v617 = vmax.f32 %v585, %v553
  %v618 = vmax.f32 %v586, %v554
  %v619 = vmax.f32 %v587, %v555
  %v620 = vmax.f32 %v588, %v556
  %v621 = vmax.f32 %v589, %v557
  %v622 = vmax.f32 %v590, %v558
  %v623 = vmax.f32 %v591, %v559
  %v624 = vmax.f32 %v592, %v560
  %v625 = vmax.f32 %v593, %v561
  %v626 = vmax.f32 %v594, %v562
  %627 = vst.msk [vmem:[%s1] sm:$0xff] %vm8, %v595
  %628 = vst.msk [vmem:[%s1 + $0x8] sm:$0xff] %vm8, %v596
  %629 = vst.msk [vmem:[%s1 + $0x10] sm:$0xff] %vm8, %v597
  %630 = vst.msk [vmem:[%s1 + $0x18] sm:$0xff] %vm8, %v598
  %631 = vst.msk [vmem:[%s1 + $0x20] sm:$0xff] %vm8, %v599
  %632 = vst.msk [vmem:[%s1 + $0x28] sm:$0xff] %vm8, %v600
  %633 = vst.msk [vmem:[%s1 + $0x30] sm:$0xff] %vm8, %v601
  %634 = vst.msk [vmem:[%s1 + $0x38] sm:$0xff] %vm8, %v602
  %635 = vst.msk [vmem:[%s1 + $0x40] sm:$0xff] %vm8, %v603
  %636 = vst.msk [vmem:[%s1 + $0x48] sm:$0xff] %vm8, %v604
  %637 = vst.msk [vmem:[%s1 + $0x50] sm:$0xff] %vm8, %v605
  %638 = vst.msk [vmem:[%s1 + $0x58] sm:$0xff] %vm8, %v606
  %639 = vst.msk [vmem:[%s1 + $0x60] sm:$0xff] %vm8, %v607
  %640 = vst.msk [vmem:[%s1 + $0x68] sm:$0xff] %vm8, %v608
  %641 = vst.msk [vmem:[%s1 + $0x70] sm:$0xff] %vm8, %v609
  %642 = vst.msk [vmem:[%s1 + $0x78] sm:$0xff] %vm8, %v610
  %643 = vst.msk [vmem:[%s1 + $0x80] sm:$0xff] %vm8, %v611
  %644 = vst.msk [vmem:[%s1 + $0x88] sm:$0xff] %vm8, %v612
  %645 = vst.msk [vmem:[%s1 + $0x90] sm:$0xff] %vm8, %v613
  %646 = vst.msk [vmem:[%s1 + $0x98] sm:$0xff] %vm8, %v614
  %647 = vst.msk [vmem:[%s1 + $0xa0] sm:$0xff] %vm8, %v615
  %648 = vst.msk [vmem:[%s1 + $0xa8] sm:$0xff] %vm8, %v616
  %649 = vst.msk [vmem:[%s1 + $0xb0] sm:$0xff] %vm8, %v617
  %650 = vst.msk [vmem:[%s1 + $0xb8] sm:$0xff] %vm8, %v618
  %651 = vst.msk [vmem:[%s1 + $0xc0] sm:$0xff] %vm8, %v619
  %652 = vst.msk [vmem:[%s1 + $0xc8] sm:$0xff] %vm8, %v620
  %653 = vst.msk [vmem:[%s1 + $0xd0] sm:$0xff] %vm8, %v621
  %654 = vst.msk [vmem:[%s1 + $0xd8] sm:$0xff] %vm8, %v622
  %655 = vst.msk [vmem:[%s1 + $0xe0] sm:$0xff] %vm8, %v623
  %656 = vst.msk [vmem:[%s1 + $0xe8] sm:$0xff] %vm8, %v624
  %657 = vst.msk [vmem:[%s1 + $0xf0] sm:$0xff] %vm8, %v625
  %658 = vst.msk [vmem:[%s1 + $0xf8] sm:$0xff] %vm8, %v626
  // Predicated region
  $region6: #{tpu_custom_call.1} parent=0 // pred_check
    _
  $region7: #{tpu_custom_call.1} parent=0 // pred_check_branch
    %660 = sbr.rel (0) target = $region9
  $region8: #{tpu_custom_call.1} parent=0 // pred_region
    _
  $region9: #{tpu_custom_call.1} parent=0 // pred_fallthru
    _
  // Predicated region
  $region10: #{tpu_custom_call.1} parent=0 // pred_check
    _
  $region11: #{tpu_custom_call.1} parent=0 // pred_check_branch
    %662 = sbr.rel (0) target = $region13
  $region12: #{tpu_custom_call.1} parent=0 // pred_region
    _
  $region13: #{tpu_custom_call.1} parent=0 // pred_fallthru
    _

</llo_original>
